<compile_context>
chip_gen: v6e
topology: v6e:2x2x1
jax: 0.10.0
libtpu: 0.0.40
codegen_flags: <defaults>
</compile_context>

<pallas_src>
import jax
import jax.numpy as jnp
from jax.experimental import pallas as pl
from jax.experimental.pallas import tpu as pltpu


def _make_attention_pooling_kernel(s_orig):
    """Build the kernel, closing over the unpadded sequence length."""

    def kernel(x_ref, w1_ref, b1_ref, w2_ref, b2_ref, o_ref):
        bt, s, e = x_ref.shape
        x = x_ref[...]                                          # (Bt, S, E)

        # ---- fc1 for all Bt*S tokens in one MXU matmul -------------------
        # Free view: S is padded to a multiple of 8 in the wrapper, so the
        # flatten does not cross (8,128) tile boundaries.
        x2d = x.reshape(bt * s, e)                              # (Bt*S, E)
        h = jnp.tanh(
            jnp.dot(x2d, w1_ref[...], preferred_element_type=jnp.float32)
            + b1_ref[...]                                       # (1, Q)
        )                                                       # (Bt*S, Q) f32

        # ---- fc2 as a VPU/XLU lane reduction (no N=1 MXU matmul) ---------
        a = jnp.sum(h * w2_ref[...], axis=-1, keepdims=True) + b2_ref[0]
        a = a.reshape(bt, s)                        # sequence on the lane axis

        # Mask sequence positions added by wrapper padding.
        if s != s_orig:
            pos = jax.lax.broadcasted_iota(jnp.int32, (bt, s), 1)
            a = jnp.where(pos < s_orig, a, -1e9)

        # ---- softmax over the sequence axis (lane-dense, exact divide) ---
        a = a - jnp.max(a, axis=-1, keepdims=True)
        p = jnp.exp(a)
        alpha = p / jnp.sum(p, axis=-1, keepdims=True)          # (Bt, S) f32

        # ---- r[b] = sum_s alpha[b,s] * x[b,s,:] as a batched MXU matmul --
        # (avoids materializing a (Bt,S,E) f32 elementwise product and the
        #  cross-sublane XLU reduce of the previous version)
        alpha3 = alpha.reshape(bt, 1, s).astype(x.dtype)
        r = jnp.einsum("bqs,bse->bqe", alpha3, x,
                       preferred_element_type=jnp.float32)      # (Bt, 1, E)
        o_ref[...] = r.reshape(bt, e).astype(o_ref.dtype)

    return kernel


def _vmem_config():
    """(vmem_limit_bytes, per-step tile budget) sized per TPU generation."""
    try:
        cap = int(pltpu.get_tpu_info().vmem_capacity_bytes)
    except Exception:
        cap = 64 << 20                  # be conservative if we cannot query
    if cap <= (64 << 20):               # v7x: 64 MiB physical per TensorCore
        return 48 << 20, 12 << 20
    return 96 << 20, 28 << 20           # v5e / v6e: 128 MiB


def _choose_block_b(B, S, E, Q, itemsize, *, vmem_budget_bytes,
                    target_rows=1024, min_steps=4):
    """Pick the batch tile Bt.

    Accounts for the double-buffered x/out tiles *and* the in-kernel f32
    temporaries (h, logits/alpha, r) so the tile actually fits the
    generation-aware VMEM budget; keeps the (Bt, E) output tile
    sublane-aligned (Bt multiple of 8, or Bt == B so the block equals the
    full dim); and keeps >= min_steps grid steps when the batch is large
    enough so both v7x TensorCores get >= 2 steps each.
    """
    def tile_bytes(bt):
        return (2 * bt * S * E * itemsize      # x tile, double-buffered
                + 2 * bt * E * itemsize        # out tile, double-buffered
                + bt * S * Q * 4               # h (f32)
                + 3 * bt * S * 4               # logits / exp / alpha (f32)
                + bt * E * 4                   # r before cast (f32)
                + (E * Q + 2 * Q + 16) * 4)    # weights + biases

    candidates = [bt for bt in ([B] + list(range(8, B, 8)))
                  if tile_bytes(bt) <= vmem_budget_bytes]
    if not candidates:
        return min(B, 8)
    # Big enough to amortize the ~0.35us per-grid-step overhead...
    big_enough = [bt for bt in candidates if bt * S >= target_rows]
    bt = min(big_enough) if big_enough else max(candidates)
    # ...but keep >= min_steps grid steps when the batch allows it.
    if B >= min_steps * 8:
        stepped = [c for c in candidates if pl.cdiv(B, c) >= min_steps]
        if stepped:
            bt = min(bt, max(stepped))
    return bt


def attention_pooling(x, w1, b1, w2, b2, *, block_b=None, vmem_limit_bytes=None):
    """x: (B, S, E), w1: (E, Q), b1: (Q,), w2: (Q, 1), b2: (1,) -> (B, E)."""
    B, S, E = x.shape
    Q = w1.shape[1]

    limit_default, vmem_budget = _vmem_config()
    if vmem_limit_bytes is None:
        vmem_limit_bytes = limit_default

    # Pad S to a multiple of 8 so the in-kernel flatten is a free view; the
    # padded positions are masked before the softmax inside the kernel.
    S_pad = max(8, ((S + 7) // 8) * 8)

    if block_b is None:
        block_b = _choose_block_b(B, S_pad, E, Q, x.dtype.itemsize,
                                  vmem_budget_bytes=vmem_budget)
    grid_b = pl.cdiv(B, block_b)
    B_pad = grid_b * block_b

    x_in = x
    if B_pad != B or S_pad != S:
        x_in = jnp.pad(x, ((0, B_pad - B), (0, S_pad - S), (0, 0)))

    b1_2d = b1.reshape(1, Q)
    w2_row = w2.reshape(1, Q)          # row layout for the lane reduction
    b2_1d = b2.reshape(1)              # scalar -> SMEM

    # Advisory cost estimate so XLA can schedule around this mem-bound call.
    itemsize = x.dtype.itemsize
    flops = (2 * B_pad * S_pad * E * Q      # fc1
             + 2 * B_pad * S_pad * Q        # fc2 lane reduction
             + 6 * B_pad * S_pad            # softmax elementwise
             + 2 * B_pad * S_pad * E)       # alpha-weighted sum
    transcendentals = B_pad * S_pad * Q + B_pad * S_pad   # tanh + exp
    bytes_accessed = (B_pad * S_pad * E * itemsize        # x in
                      + (E * Q + 2 * Q + 1) * 4           # weights / biases
                      + B_pad * E * itemsize)             # output
    cost = pl.CostEstimate(flops=int(flops),
                           transcendentals=int(transcendentals),
                           bytes_accessed=int(bytes_accessed))

    kernel = _make_attention_pooling_kernel(S)

    out = pl.pallas_call(
        kernel,
        out_shape=jax.ShapeDtypeStruct((B_pad, E), x.dtype),
        grid_spec=pltpu.PrefetchScalarGridSpec(
            num_scalar_prefetch=0,
            grid=(grid_b,),
            in_specs=[
                pl.BlockSpec((block_b, S_pad, E), lambda i: (i, 0, 0)),  # x
                pl.BlockSpec((E, Q), lambda i: (0, 0)),                  # W1
                pl.BlockSpec((1, Q), lambda i: (0, 0)),                  # b1
                pl.BlockSpec((1, Q), lambda i: (0, 0)),                  # W2 row
                pl.BlockSpec(memory_space=pltpu.MemorySpace.SMEM),       # b2
            ],
            out_specs=pl.BlockSpec((block_b, E), lambda i: (i, 0)),
        ),
        compiler_params=pltpu.CompilerParams(
            dimension_semantics=("parallel",),
            vmem_limit_bytes=int(vmem_limit_bytes),
        ),
        cost_estimate=cost,
    )(x_in, w1, b1_2d, w2_row, b2_1d)

    return out if B_pad == B else out[:B]


def _reference(x, w1, b1, w2, b2):
    h = jnp.tanh(x @ w1 + b1)                       # (B, S, Q)
    a = h @ w2 + b2                                 # (B, S, 1)
    alpha = jax.nn.softmax(a, axis=-2)              # softmax over seq
    r = jnp.squeeze(jnp.swapaxes(alpha, -2, -1) @ x, axis=-2)
    return r


if __name__ == "__main__":
    B, S, E, Q = 4, 8, 32, 16

    key = jax.random.PRNGKey(0)
    kx, kw1, kb1, kw2, kb2 = jax.random.split(key, 5)

    x = jax.random.normal(kx, (B, S, E), dtype=jnp.float32)
    w1 = jax.random.normal(kw1, (E, Q), dtype=jnp.float32) * 0.1
    b1 = jax.random.normal(kb1, (Q,), dtype=jnp.float32) * 0.1
    w2 = jax.random.normal(kw2, (Q, 1), dtype=jnp.float32) * 0.1
    b2 = jax.random.normal(kb2, (1,), dtype=jnp.float32) * 0.1

    out = attention_pooling(x, w1, b1, w2, b2)
    out = jax.block_until_ready(out)

    ref = _reference(x, w1, b1, w2, b2)
    assert out.shape == (B, E), out.shape
    err = float(jnp.max(jnp.abs(out - ref)))
    assert jnp.allclose(out, ref, atol=1e-4, rtol=1e-4), f"max abs err {err}"

    print("KERNEL_OK")
</pallas_src>

<mosaic_0001>
module attributes {stable_mosaic.version = 11 : i64} {
  func.func @kernel(%arg0: i32, %arg1: memref<4x8x32xf32, #tpu.memory_space<vmem>>, %arg2: memref<32x16xf32, #tpu.memory_space<vmem>>, %arg3: memref<1x16xf32, #tpu.memory_space<vmem>>, %arg4: memref<1x16xf32, #tpu.memory_space<vmem>>, %arg5: memref<1xf32, #tpu.memory_space<smem>>, %arg6: memref<4x32xf32, #tpu.memory_space<vmem>>) attributes {dimension_semantics = [#tpu.dimension_semantics<parallel>], iteration_bounds = array<i64: 1>, scalar_prefetch = 0 : i64, scratch_operands = 0 : i64, tpu.core_type = #tpu.core_type<tc>, window_params = [{transform_indices = @transform_0, window_bounds = array<i64: 4, 8, 32>}, {pipeline_mode = #tpu.pipeline_mode<synchronous>, transform_indices = @transform_1, window_bounds = array<i64: 32, 16>}, {pipeline_mode = #tpu.pipeline_mode<synchronous>, transform_indices = @transform_2, window_bounds = array<i64: 1, 16>}, {pipeline_mode = #tpu.pipeline_mode<synchronous>, transform_indices = @transform_3, window_bounds = array<i64: 1, 16>}, {transform_indices = @transform_4, window_bounds = array<i64: 1>}, {transform_indices = @transform_5, window_bounds = array<i64: 4, 32>}]} {
    %c0 = arith.constant 0 : index
    %c0_0 = arith.constant 0 : index
    %c0_1 = arith.constant 0 : index
    %0 = vector.load %arg1[%c0, %c0_0, %c0_1] : memref<4x8x32xf32, #tpu.memory_space<vmem>>, vector<4x8x32xf32>
    %1 = vector.shape_cast %0 : vector<4x8x32xf32> to vector<32x32xf32>
    %c0_2 = arith.constant 0 : index
    %c0_3 = arith.constant 0 : index
    %2 = vector.load %arg2[%c0_2, %c0_3] : memref<32x16xf32, #tpu.memory_space<vmem>>, vector<32x16xf32>
    %cst = arith.constant dense<0.000000e+00> : vector<32x16xf32>
    %3 = tpu.matmul %1, %2, %cst {dimension_numbers = #tpu.dot_dimension_numbers<[1], [0], [0], [1], [0, 0, 1, 1], [], []>} : vector<32x32xf32>, vector<32x16xf32>, vector<32x16xf32> -> vector<32x16xf32>
    %c0_4 = arith.constant 0 : index
    %c0_5 = arith.constant 0 : index
    %4 = vector.load %arg3[%c0_4, %c0_5] : memref<1x16xf32, #tpu.memory_space<vmem>>, vector<1x16xf32>
    %5 = vector.broadcast %4 : vector<1x16xf32> to vector<32x16xf32>
    %6 = arith.addf %3, %5 : vector<32x16xf32>
    %7 = math.tanh %6 : vector<32x16xf32>
    %c0_6 = arith.constant 0 : index
    %c0_7 = arith.constant 0 : index
    %8 = vector.load %arg4[%c0_6, %c0_7] : memref<1x16xf32, #tpu.memory_space<vmem>>, vector<1x16xf32>
    %9 = vector.broadcast %8 : vector<1x16xf32> to vector<32x16xf32>
    %10 = arith.mulf %7, %9 : vector<32x16xf32>
    %cst_8 = arith.constant dense<0.000000e+00> : vector<32xf32>
    %11 = vector.multi_reduction <add>, %10, %cst_8 [1] : vector<32x16xf32> to vector<32xf32>
    %12 = vector.shape_cast %11 : vector<32xf32> to vector<32x1xf32>
    %c0_9 = arith.constant 0 : index
    %13 = memref.load %arg5[%c0_9] : memref<1xf32, #tpu.memory_space<smem>>
    %14 = vector.broadcast %13 : f32 to vector<32x1xf32>
    %15 = arith.addf %12, %14 : vector<32x1xf32>
    %16 = vector.shape_cast %15 : vector<32x1xf32> to vector<4x8xf32>
    %cst_10 = arith.constant dense<0xFF800000> : vector<4xf32>
    %17 = vector.multi_reduction <maximumf>, %16, %cst_10 [1] : vector<4x8xf32> to vector<4xf32>
    %18 = vector.shape_cast %17 : vector<4xf32> to vector<4x1xf32>
    %19 = vector.broadcast %18 : vector<4x1xf32> to vector<4x8xf32>
    %20 = arith.subf %16, %19 : vector<4x8xf32>
    %21 = math.exp %20 : vector<4x8xf32>
    %cst_11 = arith.constant dense<0.000000e+00> : vector<4xf32>
    %22 = vector.multi_reduction <add>, %21, %cst_11 [1] : vector<4x8xf32> to vector<4xf32>
    %23 = vector.shape_cast %22 : vector<4xf32> to vector<4x1xf32>
    %24 = vector.broadcast %23 : vector<4x1xf32> to vector<4x8xf32>
    %25 = arith.divf %21, %24 : vector<4x8xf32>
    %26 = vector.shape_cast %25 : vector<4x8xf32> to vector<4x1x8xf32>
    "tpu.trace_start"() <{level = 10 : i32, message = "bqs,bse->bqe"}> : () -> ()
    %cst_12 = arith.constant dense<0.000000e+00> : vector<4x1x32xf32>
    %27 = tpu.matmul %26, %0, %cst_12 {dimension_numbers = #tpu.dot_dimension_numbers<[2], [1], [1], [2], [0, 0, 0, 1, 1, 2], [0], [0]>} : vector<4x1x8xf32>, vector<4x8x32xf32>, vector<4x1x32xf32> -> vector<4x1x32xf32>
    "tpu.trace_stop"() : () -> ()
    %28 = vector.shape_cast %27 : vector<4x1x32xf32> to vector<4x32xf32>
    %c0_13 = arith.constant 0 : index
    %c0_14 = arith.constant 0 : index
    %29 = vector.load %arg6[%c0_13, %c0_14] : memref<4x32xf32, #tpu.memory_space<vmem>>, vector<4x32xf32>
    tpu.vector_store %arg6[%c0_13, %c0_14], %28 {strides = array<i32>} : memref<4x32xf32, #tpu.memory_space<vmem>>, vector<4x32xf32>,
    return
  }
  func.func @transform_0(%arg0: i32) -> (i32, i32, i32) {
    %c0_i32 = arith.constant 0 : i32
    %c0_i32_0 = arith.constant 0 : i32
    %c0_i32_1 = arith.constant 0 : i32
    return %arg0, %c0_i32, %c0_i32_0 : i32, i32, i32
  }
  func.func @transform_1(%arg0: i32) -> (i32, i32) {
    %c0_i32 = arith.constant 0 : i32
    %c0_i32_0 = arith.constant 0 : i32
    %c0_i32_1 = arith.constant 0 : i32
    return %c0_i32, %c0_i32_0 : i32, i32
  }
  func.func @transform_2(%arg0: i32) -> (i32, i32) {
    %c0_i32 = arith.constant 0 : i32
    %c0_i32_0 = arith.constant 0 : i32
    %c0_i32_1 = arith.constant 0 : i32
    return %c0_i32, %c0_i32_0 : i32, i32
  }
  func.func @transform_3(%arg0: i32) -> (i32, i32) {
    %c0_i32 = arith.constant 0 : i32
    %c0_i32_0 = arith.constant 0 : i32
    %c0_i32_1 = arith.constant 0 : i32
    return %c0_i32, %c0_i32_0 : i32, i32
  }
  func.func @transform_4(%arg0: i32) -> i32 {
    %c0_i32 = arith.constant 0 : i32
    %c0_i32_0 = arith.constant 0 : i32
    return %c0_i32 : i32
  }
  func.func @transform_5(%arg0: i32) -> (i32, i32) {
    %c0_i32 = arith.constant 0 : i32
    %c0_i32_0 = arith.constant 0 : i32
    return %arg0, %c0_i32 : i32, i32
  }
}

</mosaic_0001>

<llo_original>
// kernel: tpu_custom_call.1
$region0: #{tpu_custom_call.1}
  #allocation0 [shape = 'u32[]', space=smem, size = 0x4, offset = 0x4, fixed_abs, tag = 'smem constant byte address 0x4 - core index']
  #allocation1 [shape = 'u32[144,128]{1,0:T(1,128)}', space=vmem, size = 0x12000, scoped, tag = 'internal scratch']
  #allocation2 [shape = 'f32[1]{0:T(128)S(6)}', space=smem, size = 0x200, scoped, tag = 'scoped memory for tpu_custom_call.1']
  %s0 = inlined_call_operand.vmem [shape: f32[4,8,32], index: 0, kind: input, shape index: {}]
  %s1 = inlined_call_operand.vmem [shape: f32[32,16], index: 1, kind: input, shape index: {}]
  %s2 = inlined_call_operand.vmem [shape: f32[1,16], index: 2, kind: input, shape index: {}]
  %s3 = inlined_call_operand.vmem [shape: f32[1,16], index: 3, kind: input, shape index: {}]
  %s4 = inlined_call_operand.<no memory space> [shape: f32[1], index: 4, kind: input, shape index: {}]
  %s5 = inlined_call_operand.hbm [shape: f32[4,32], index: 5, kind: output, shape index: {}]
  %s6 = sld [smem:[#allocation0]]
  $region30: #{tpu_custom_call.1} parent=0
    _
  %s8 = ssub.s32 1, %s6
  %s9 = scalar_select 0, %s8, %s6
  %10 = sst [smem:[#allocation2]] %s4
  $region1: #{tpu_custom_call.1} parent=0
    #allocation3 [shape = 'u8[2048]{0}', space=vmem, size = 0x800, scoped, tag = 'output window, operand 0, single buffered']
    #allocation4 [shape = 's32[1]{0}', space=sflag, size = 0x4, scoped, tag = 'scoped memory for tpu_custom_call.1']
    %11 = vsyncpa [#allocation4], 0
    // Predicated region
    $region2: #{tpu_custom_call.1} parent=1 // pred_check
      _
    $region3: #{tpu_custom_call.1} parent=1 // pred_check_branch
      %13 = sbr.rel (0) target = $region5
    $region4: #{tpu_custom_call.1} parent=1 // pred_region
      _
    $region5: #{tpu_custom_call.1} parent=1 // pred_fallthru
      _
    // Predicated region
    $region6: #{tpu_custom_call.1} parent=1 // pred_check
      _
    $region7: #{tpu_custom_call.1} parent=1 // pred_check_branch
      %15 = sbr.rel (0) target = $region9
    $region8: #{tpu_custom_call.1} parent=1 // pred_region
      _
    $region9: #{tpu_custom_call.1} parent=1 // pred_fallthru
      _
    // Predicated region
    $region10: #{tpu_custom_call.1} parent=1 // pred_check
      _
    $region11: #{tpu_custom_call.1} parent=1 // pred_check_branch
      %17 = sbr.rel (0) target = $region13
    $region12: #{tpu_custom_call.1} parent=1 // pred_region
      _
    $region13: #{tpu_custom_call.1} parent=1 // pred_fallthru
      _
    // Predicated region
    $region14: #{tpu_custom_call.1} parent=1 // pred_check
      _
    $region15: #{tpu_custom_call.1} parent=1 // pred_check_branch
      %19 = sbr.rel (0) target = $region17
    $region16: #{tpu_custom_call.1} parent=1 // pred_region
      _
    $region17: #{tpu_custom_call.1} parent=1 // pred_fallthru
      _
    // Predicated region
    $region18: #{tpu_custom_call.1} parent=1 // pred_check
      _
    $region19: #{tpu_custom_call.1} parent=1 // pred_check_branch
      %21 = sbr.rel (0) target = $region21
    $region20: #{tpu_custom_call.1} parent=1 // pred_region
      _
    $region21: #{tpu_custom_call.1} parent=1 // pred_fallthru
      _
    %v22 = vld [vmem:[%s0] sm:$0xff]
    %v23 = vld [vmem:[%s0 + $0x8] sm:$0xff]
    %v24 = vld [vmem:[%s0 + $0x10] sm:$0xff]
    %v25 = vld [vmem:[%s0 + $0x18] sm:$0xff]
    %v26 = vld [vmem:[%s1] sm:$0xff]
    %v27 = vld [vmem:[%s1 + $0x8] sm:$0xff]
    %v28 = vld [vmem:[%s1 + $0x10] sm:$0xff]
    %v29 = vld [vmem:[%s1 + $0x18] sm:$0xff]
    %v30 = vld [vmem:[%s2] sm:$0x1]
    %v32 = vlaneseq
    %v33 = vshrl.u32 %v32, 7
    %v34 = vsub.s32 0, %v33
    %v35 = vrot.slane %v30, %v34
    %vm37 = vcmask 261120
    %v39 = vsel %vm37, %v22, 0
    %v42 = vsel %vm37, %v23, 0
    %v45 = vsel %vm37, %v24, 0
    %v48 = vsel %vm37, %v25, 0
    %50 = vmatprep.subr.mxu0 0.0
    %51 = vmatpush1.msra.mxu0 0.0
    %52 = vmatprep.subr.mxu0 0.0
    %53 = vmatpush1.msra.mxu0 0.0
    %54 = vmatprep.subr.mxu0 0.0
    %55 = vmatpush1.msra.mxu0 0.0
    %56 = vmatprep.subr.mxu0 0.0
    %57 = vmatpush1.msra.mxu0 0.0
    %58 = vmatprep.subr.mxu0 0.0
    %59 = vmatpush1.msra.mxu0 0.0
    %60 = vmatprep.subr.mxu0 0.0
    %61 = vmatpush1.msra.mxu0 0.0
    %62 = vmatprep.subr.mxu0 0.0
    %63 = vmatpush1.msra.mxu0 0.0
    %64 = vmatprep.subr.mxu0 0.0
    %65 = vmatpush1.msra.mxu0 0.0
    %66 = vmatprep.subr.mxu0 0.0
    %67 = vmatpush1.msra.mxu0 0.0
    %68 = vmatprep.subr.mxu0 0.0
    %69 = vmatpush1.msra.mxu0 0.0
    %70 = vmatprep.subr.mxu0 0.0
    %71 = vmatpush1.msra.mxu0 0.0
    %72 = vmatprep.subr.mxu0 0.0
    %73 = vmatpush1.msra.mxu0 0.0
    %74 = vmatprep.subr.mxu0 0.0
    %75 = vmatpush1.msra.mxu0 %v29
    %76 = vmatprep.subr.mxu0 0.0
    %77 = vmatpush1.msra.mxu0 %v28
    %78 = vmatprep.subr.mxu0 0.0
    %79 = vmatpush1.msra.mxu0 %v27
    %80 = vmatprep.subr.mxu0 0.0
    %81 = vmatpush1.msra.mxu0 %v26
    %82 = vmatprep.subr.mxu0 0.0
    %83 = vmatpush2.msra.mxu0 0.0
    %84 = vmatprep.subr.mxu0 0.0
    %85 = vmatpush2.msra.mxu0 0.0
    %86 = vmatprep.subr.mxu0 0.0
    %87 = vmatpush2.msra.mxu0 0.0
    %88 = vmatprep.subr.mxu0 0.0
    %89 = vmatpush2.msra.mxu0 0.0
    %90 = vmatprep.subr.mxu0 0.0
    %91 = vmatpush2.msra.mxu0 0.0
    %92 = vmatprep.subr.mxu0 0.0
    %93 = vmatpush2.msra.mxu0 0.0
    %94 = vmatprep.subr.mxu0 0.0
    %95 = vmatpush2.msra.mxu0 0.0
    %96 = vmatprep.subr.mxu0 0.0
    %97 = vmatpush2.msra.mxu0 0.0
    %98 = vmatprep.subr.mxu0 0.0
    %99 = vmatpush2.msra.mxu0 0.0
    %100 = vmatprep.subr.mxu0 0.0
    %101 = vmatpush2.msra.mxu0 0.0
    %102 = vmatprep.subr.mxu0 0.0
    %103 = vmatpush2.msra.mxu0 0.0
    %104 = vmatprep.subr.mxu0 0.0
    %105 = vmatpush2.msra.mxu0 0.0
    %106 = vmatprep.subr.mxu0 0.0
    %107 = vmatpush2.msra.mxu0 0.0
    %108 = vmatprep.subr.mxu0 0.0
    %109 = vmatpush2.msra.mxu0 0.0
    %110 = vmatprep.subr.mxu0 0.0
    %111 = vmatpush2.msra.mxu0 0.0
    %112 = vmatprep.subr.mxu0 0.0
    %113 = vmatpush2.msra.mxu0 0.0
    %114 = vmatprep.mubr.f32.mxu0 0.0
    %115 = vmatmul.mubr.f32.gmra.mxu0 %v39
    %v116 = vpop.f32.mrf.mxu0
    %v117 = vadd.f32 %v35, %v116
    %v118 = vpop.f32.mrf.mxu0
    %119 = vmatprep.mubr.f32.mxu0 0.0
    %120 = vmatmul.mubr.f32.gmra.mxu0 %v42
    %v121 = vpop.f32.mrf.mxu0
    %v122 = vadd.f32 %v35, %v121
    %v123 = vpop.f32.mrf.mxu0
    %124 = vmatprep.mubr.f32.mxu0 0.0
    %125 = vmatmul.mubr.f32.gmra.mxu0 %v45
    %v126 = vpop.f32.mrf.mxu0
    %v127 = vadd.f32 %v35, %v126
    %v128 = vpop.f32.mrf.mxu0
    %129 = vmatprep.mubr.f32.mxu0 0.0
    %130 = vmatmul.mubr.f32.gmra.mxu0 %v48
    %v131 = vpop.f32.mrf.mxu0
    %v132 = vadd.f32 %v35, %v131
    %v133 = vpop.f32.mrf.mxu0
    %134 = vdwg.mxu0
    %v135 = vtanh.pop %v117
    %v136 = vtanh.pop %v122
    %v137 = vtanh.pop %v127
    %v138 = vtanh.pop %v132
    %v139 = vld [vmem:[%s3] sm:$0x1]
    %v141 = vlaneseq
    %v142 = vshrl.u32 %v141, 7
    %v143 = vsub.s32 0, %v142
    %v144 = vrot.slane %v139, %v143
    %v146 = vmul.f32 %v135, %v144
    %v147 = vmul.f32 %v136, %v144
    %v148 = vmul.f32 %v137, %v144
    %v149 = vmul.f32 %v138, %v144
    %vm150 = vcmask 130048
    %v151 = vsel %vm150, %v146, 0.0
    %152 = vadd.xlane.f32.xlu0 %v151
    %v153 = vpop.xlane.xlu0 %152
    %v154 = vsel %vm150, %v147, 0.0
    %155 = vadd.xlane.f32.xlu0 %v154
    %v156 = vpop.xlane.xlu0 %155
    %v157 = vsel %vm150, %v148, 0.0
    %158 = vadd.xlane.f32.xlu0 %v157
    %v159 = vpop.xlane.xlu0 %158
    %v160 = vsel %vm150, %v149, 0.0
    %161 = vadd.xlane.f32.xlu0 %v160
    %v162 = vpop.xlane.xlu0 %161
    %s163 = sld [smem:[#allocation2]]
    %v164 = vstv %s163
    %v165 = vadd.f32 %v153, %v164
    %v166 = vadd.f32 %v156, %v164
    %v167 = vadd.f32 %v159, %v164
    %v168 = vadd.f32 %v162, %v164
    %v173 = vlaneseq
    %v174 = vand.u32 %v173, 127
    %v175 = vlaneseq
    %v176 = vshrl.u32 %v175, 7
    %v177 = vsub.s32 %v174, %v176
    %v178 = vrot.slane %v165, %v177
    %v179 = vlaneseq
    %v180 = vshrl.u32 %v179, 7
    %v181 = vsub.s32 %v174, %v180
    %v182 = vrot.slane %v166, %v181
    %v183 = vlaneseq
    %v184 = vshrl.u32 %v183, 7
    %v185 = vsub.s32 %v174, %v184
    %v186 = vrot.slane %v167, %v185
    %v187 = vlaneseq
    %v188 = vshrl.u32 %v187, 7
    %v189 = vsub.s32 %v174, %v188
    %v190 = vrot.slane %v168, %v189
    %vm191 = vcmask 1041409
    %v192 = vsel %vm191, %v182, %v178
    %vm193 = vcmask 1042434
    %v194 = vsel %vm193, %v186, %v192
    %vm195 = vcmask 1043459
    %v196 = vsel %vm195, %v190, %v194
    %vm198 = vcmask 60416
    %v199 = vsel %vm198, %v196, -inf
    %200 = vmax.xlane.f32.xlu0 %v199
    %v201 = vpop.xlane.xlu0 %200
    %v203 = vlaneseq
    %v204 = vshrl.u32 %v203, 7
    %v205 = vsub.s32 0, %v204
    %v206 = vrot.slane %v201, %v205
    %v207 = vlaneseq
    %v208 = vshrl.u32 %v207, 7
    %v209 = vsub.s32 1, %v208
    %v210 = vrot.slane %v201, %v209
    %v211 = vlaneseq
    %v212 = vshrl.u32 %v211, 7
    %v213 = vsub.s32 2, %v212
    %v214 = vrot.slane %v201, %v213
    %v215 = vlaneseq
    %v216 = vshrl.u32 %v215, 7
    %v217 = vsub.s32 3, %v216
    %v218 = vrot.slane %v201, %v217
    %v223 = vsub.f32 %v165, %v206
    %v224 = vsub.f32 %v166, %v210
    %v225 = vsub.f32 %v167, %v214
    %v226 = vsub.f32 %v168, %v218
    %v227 = vmul.f32 %v223, 1.442695
    %v228 = vpow.pop %v227
    %v229 = vmul.f32 %v224, 1.442695
    %v230 = vpow.pop %v229
    %v231 = vmul.f32 %v225, 1.442695
    %v232 = vpow.pop %v231
    %v233 = vmul.f32 %v226, 1.442695
    %v234 = vpow.pop %v233
    %239 = vset.pattern.permute.xlu0 0
    %240 = vperm.xlu0 %239, %v228
    %v241 = vpop.permute.xlu0 %240
    %242 = vset.pattern.permute.xlu0 0
    %243 = vperm.xlu0 %242, %v230
    %v244 = vpop.permute.xlu0 %243
    %245 = vset.pattern.permute.xlu0 0
    %246 = vperm.xlu0 %245, %v232
    %v247 = vpop.permute.xlu0 %246
    %248 = vset.pattern.permute.xlu0 0
    %249 = vperm.xlu0 %248, %v234
    %v250 = vpop.permute.xlu0 %249
    %v251 = vlaneseq
    %v252 = vshrl.u32 %v251, 7
    %v253 = vsub.s32 %v174, %v252
    %v254 = vrot.slane %v241, %v253
    %v255 = vlaneseq
    %v256 = vshrl.u32 %v255, 7
    %v257 = vsub.s32 %v174, %v256
    %v258 = vrot.slane %v244, %v257
    %v259 = vlaneseq
    %v260 = vshrl.u32 %v259, 7
    %v261 = vsub.s32 %v174, %v260
    %v262 = vrot.slane %v247, %v261
    %v263 = vlaneseq
    %v264 = vshrl.u32 %v263, 7
    %v265 = vsub.s32 %v174, %v264
    %v266 = vrot.slane %v250, %v265
    %v267 = vsel %vm191, %v258, %v254
    %v268 = vsel %vm193, %v262, %v267
    %v269 = vsel %vm195, %v266, %v268
    %v271 = vsel %vm198, %v269, 0.0
    %272 = vadd.xlane.f32.xlu0 %v271
    %v273 = vpop.xlane.xlu0 %272
    %v275 = vlaneseq
    %v276 = vshrl.u32 %v275, 7
    %v277 = vsub.s32 0, %v276
    %v278 = vrot.slane %v273, %v277
    %v279 = vlaneseq
    %v280 = vshrl.u32 %v279, 7
    %v281 = vsub.s32 1, %v280
    %v282 = vrot.slane %v273, %v281
    %v283 = vlaneseq
    %v284 = vshrl.u32 %v283, 7
    %v285 = vsub.s32 2, %v284
    %v286 = vrot.slane %v273, %v285
    %v287 = vlaneseq
    %v288 = vshrl.u32 %v287, 7
    %v289 = vsub.s32 3, %v288
    %v290 = vrot.slane %v273, %v289
    %v295 = vrcp.pop %v278
    %v296 = vmul.f32 %v228, %v295
    %v297 = vrcp.pop %v282
    %v298 = vmul.f32 %v230, %v297
    %v299 = vrcp.pop %v286
    %v300 = vmul.f32 %v232, %v299
    %v301 = vrcp.pop %v290
    %v302 = vmul.f32 %v234, %v301
    %304 = vset.pattern.permute.xlu0 0
    %305 = vperm.xlu0 %304, %v296
    %v306 = vpop.permute.xlu0 %305
    %v307 = vlaneseq
    %v308 = vshrl.u32 %v307, 7
    %v309 = vsub.s32 %v174, %v308
    %v310 = vrot.slane %v306, %v309
    %vm311 = vcmask 64512
    %v312 = vsel %vm311, %v310, 0
    %314 = vmatprep.subr.mxu0 0.0
    %315 = vmatpush1.msra.mxu0 0.0
    %316 = vmatprep.subr.mxu0 0.0
    %317 = vmatpush1.msra.mxu0 0.0
    %318 = vmatprep.subr.mxu0 0.0
    %319 = vmatpush1.msra.mxu0 0.0
    %320 = vmatprep.subr.mxu0 0.0
    %321 = vmatpush1.msra.mxu0 0.0
    %322 = vmatprep.subr.mxu0 0.0
    %323 = vmatpush1.msra.mxu0 0.0
    %324 = vmatprep.subr.mxu0 0.0
    %325 = vmatpush1.msra.mxu0 0.0
    %326 = vmatprep.subr.mxu0 0.0
    %327 = vmatpush1.msra.mxu0 0.0
    %328 = vmatprep.subr.mxu0 0.0
    %329 = vmatpush1.msra.mxu0 0.0
    %330 = vmatprep.subr.mxu0 0.0
    %331 = vmatpush1.msra.mxu0 0.0
    %332 = vmatprep.subr.mxu0 0.0
    %333 = vmatpush1.msra.mxu0 0.0
    %334 = vmatprep.subr.mxu0 0.0
    %335 = vmatpush1.msra.mxu0 0.0
    %336 = vmatprep.subr.mxu0 0.0
    %337 = vmatpush1.msra.mxu0 0.0
    %338 = vmatprep.subr.mxu0 0.0
    %339 = vmatpush1.msra.mxu0 0.0
    %340 = vmatprep.subr.mxu0 0.0
    %341 = vmatpush1.msra.mxu0 0.0
    %342 = vmatprep.subr.mxu0 0.0
    %343 = vmatpush1.msra.mxu0 0.0
    %344 = vmatprep.subr.mxu0 0.0
    %345 = vmatpush1.msra.mxu0 %v22
    %346 = vmatprep.subr.mxu0 0.0
    %347 = vmatpush2.msra.mxu0 0.0
    %348 = vmatprep.subr.mxu0 0.0
    %349 = vmatpush2.msra.mxu0 0.0
    %350 = vmatprep.subr.mxu0 0.0
    %351 = vmatpush2.msra.mxu0 0.0
    %352 = vmatprep.subr.mxu0 0.0
    %353 = vmatpush2.msra.mxu0 0.0
    %354 = vmatprep.subr.mxu0 0.0
    %355 = vmatpush2.msra.mxu0 0.0
    %356 = vmatprep.subr.mxu0 0.0
    %357 = vmatpush2.msra.mxu0 0.0
    %358 = vmatprep.subr.mxu0 0.0
    %359 = vmatpush2.msra.mxu0 0.0
    %360 = vmatprep.subr.mxu0 0.0
    %361 = vmatpush2.msra.mxu0 0.0
    %362 = vmatprep.subr.mxu0 0.0
    %363 = vmatpush2.msra.mxu0 0.0
    %364 = vmatprep.subr.mxu0 0.0
    %365 = vmatpush2.msra.mxu0 0.0
    %366 = vmatprep.subr.mxu0 0.0
    %367 = vmatpush2.msra.mxu0 0.0
    %368 = vmatprep.subr.mxu0 0.0
    %369 = vmatpush2.msra.mxu0 0.0
    %370 = vmatprep.subr.mxu0 0.0
    %371 = vmatpush2.msra.mxu0 0.0
    %372 = vmatprep.subr.mxu0 0.0
    %373 = vmatpush2.msra.mxu0 0.0
    %374 = vmatprep.subr.mxu0 0.0
    %375 = vmatpush2.msra.mxu0 0.0
    %376 = vmatprep.subr.mxu0 0.0
    %377 = vmatpush2.msra.mxu0 0.0
    %378 = vmatprep.mubr.f32.mxu0 0.0
    %379 = vmatmul.mubr.f32.gmra.mxu0 %v312
    %v380 = vpop.f32.mrf.mxu0
    %v381 = vadd.f32 0.0, %v380
    %v382 = vpop.f32.mrf.mxu0
    %383 = vdwg.mxu0
    %385 = vset.pattern.permute.xlu0 0
    %386 = vperm.xlu0 %385, %v298
    %v387 = vpop.permute.xlu0 %386
    %v388 = vlaneseq
    %v389 = vshrl.u32 %v388, 7
    %v390 = vsub.s32 %v174, %v389
    %v391 = vrot.slane %v387, %v390
    %v392 = vsel %vm311, %v391, 0
    %394 = vmatprep.subr.mxu0 0.0
    %395 = vmatpush1.msra.mxu0 0.0
    %396 = vmatprep.subr.mxu0 0.0
    %397 = vmatpush1.msra.mxu0 0.0
    %398 = vmatprep.subr.mxu0 0.0
    %399 = vmatpush1.msra.mxu0 0.0
    %400 = vmatprep.subr.mxu0 0.0
    %401 = vmatpush1.msra.mxu0 0.0
    %402 = vmatprep.subr.mxu0 0.0
    %403 = vmatpush1.msra.mxu0 0.0
    %404 = vmatprep.subr.mxu0 0.0
    %405 = vmatpush1.msra.mxu0 0.0
    %406 = vmatprep.subr.mxu0 0.0
    %407 = vmatpush1.msra.mxu0 0.0
    %408 = vmatprep.subr.mxu0 0.0
    %409 = vmatpush1.msra.mxu0 0.0
    %410 = vmatprep.subr.mxu0 0.0
    %411 = vmatpush1.msra.mxu0 0.0
    %412 = vmatprep.subr.mxu0 0.0
    %413 = vmatpush1.msra.mxu0 0.0
    %414 = vmatprep.subr.mxu0 0.0
    %415 = vmatpush1.msra.mxu0 0.0
    %416 = vmatprep.subr.mxu0 0.0
    %417 = vmatpush1.msra.mxu0 0.0
    %418 = vmatprep.subr.mxu0 0.0
    %419 = vmatpush1.msra.mxu0 0.0
    %420 = vmatprep.subr.mxu0 0.0
    %421 = vmatpush1.msra.mxu0 0.0
    %422 = vmatprep.subr.mxu0 0.0
    %423 = vmatpush1.msra.mxu0 0.0
    %424 = vmatprep.subr.mxu0 0.0
    %425 = vmatpush1.msra.mxu0 %v23
    %426 = vmatprep.subr.mxu0 0.0
    %427 = vmatpush2.msra.mxu0 0.0
    %428 = vmatprep.subr.mxu0 0.0
    %429 = vmatpush2.msra.mxu0 0.0
    %430 = vmatprep.subr.mxu0 0.0
    %431 = vmatpush2.msra.mxu0 0.0
    %432 = vmatprep.subr.mxu0 0.0
    %433 = vmatpush2.msra.mxu0 0.0
    %434 = vmatprep.subr.mxu0 0.0
    %435 = vmatpush2.msra.mxu0 0.0
    %436 = vmatprep.subr.mxu0 0.0
    %437 = vmatpush2.msra.mxu0 0.0
    %438 = vmatprep.subr.mxu0 0.0
    %439 = vmatpush2.msra.mxu0 0.0
    %440 = vmatprep.subr.mxu0 0.0
    %441 = vmatpush2.msra.mxu0 0.0
    %442 = vmatprep.subr.mxu0 0.0
    %443 = vmatpush2.msra.mxu0 0.0
    %444 = vmatprep.subr.mxu0 0.0
    %445 = vmatpush2.msra.mxu0 0.0
    %446 = vmatprep.subr.mxu0 0.0
    %447 = vmatpush2.msra.mxu0 0.0
    %448 = vmatprep.subr.mxu0 0.0
    %449 = vmatpush2.msra.mxu0 0.0
    %450 = vmatprep.subr.mxu0 0.0
    %451 = vmatpush2.msra.mxu0 0.0
    %452 = vmatprep.subr.mxu0 0.0
    %453 = vmatpush2.msra.mxu0 0.0
    %454 = vmatprep.subr.mxu0 0.0
    %455 = vmatpush2.msra.mxu0 0.0
    %456 = vmatprep.subr.mxu0 0.0
    %457 = vmatpush2.msra.mxu0 0.0
    %458 = vmatprep.mubr.f32.mxu0 0.0
    %459 = vmatmul.mubr.f32.gmra.mxu0 %v392
    %v460 = vpop.f32.mrf.mxu0
    %v461 = vadd.f32 0.0, %v460
    %v462 = vpop.f32.mrf.mxu0
    %463 = vdwg.mxu0
    %465 = vset.pattern.permute.xlu0 0
    %466 = vperm.xlu0 %465, %v300
    %v467 = vpop.permute.xlu0 %466
    %v468 = vlaneseq
    %v469 = vshrl.u32 %v468, 7
    %v470 = vsub.s32 %v174, %v469
    %v471 = vrot.slane %v467, %v470
    %v472 = vsel %vm311, %v471, 0
    %474 = vmatprep.subr.mxu0 0.0
    %475 = vmatpush1.msra.mxu0 0.0
    %476 = vmatprep.subr.mxu0 0.0
    %477 = vmatpush1.msra.mxu0 0.0
    %478 = vmatprep.subr.mxu0 0.0
    %479 = vmatpush1.msra.mxu0 0.0
    %480 = vmatprep.subr.mxu0 0.0
    %481 = vmatpush1.msra.mxu0 0.0
    %482 = vmatprep.subr.mxu0 0.0
    %483 = vmatpush1.msra.mxu0 0.0
    %484 = vmatprep.subr.mxu0 0.0
    %485 = vmatpush1.msra.mxu0 0.0
    %486 = vmatprep.subr.mxu0 0.0
    %487 = vmatpush1.msra.mxu0 0.0
    %488 = vmatprep.subr.mxu0 0.0
    %489 = vmatpush1.msra.mxu0 0.0
    %490 = vmatprep.subr.mxu0 0.0
    %491 = vmatpush1.msra.mxu0 0.0
    %492 = vmatprep.subr.mxu0 0.0
    %493 = vmatpush1.msra.mxu0 0.0
    %494 = vmatprep.subr.mxu0 0.0
    %495 = vmatpush1.msra.mxu0 0.0
    %496 = vmatprep.subr.mxu0 0.0
    %497 = vmatpush1.msra.mxu0 0.0
    %498 = vmatprep.subr.mxu0 0.0
    %499 = vmatpush1.msra.mxu0 0.0
    %500 = vmatprep.subr.mxu0 0.0
    %501 = vmatpush1.msra.mxu0 0.0
    %502 = vmatprep.subr.mxu0 0.0
    %503 = vmatpush1.msra.mxu0 0.0
    %504 = vmatprep.subr.mxu0 0.0
    %505 = vmatpush1.msra.mxu0 %v24
    %506 = vmatprep.subr.mxu0 0.0
    %507 = vmatpush2.msra.mxu0 0.0
    %508 = vmatprep.subr.mxu0 0.0
    %509 = vmatpush2.msra.mxu0 0.0
    %510 = vmatprep.subr.mxu0 0.0
    %511 = vmatpush2.msra.mxu0 0.0
    %512 = vmatprep.subr.mxu0 0.0
    %513 = vmatpush2.msra.mxu0 0.0
    %514 = vmatprep.subr.mxu0 0.0
    %515 = vmatpush2.msra.mxu0 0.0
    %516 = vmatprep.subr.mxu0 0.0
    %517 = vmatpush2.msra.mxu0 0.0
    %518 = vmatprep.subr.mxu0 0.0
    %519 = vmatpush2.msra.mxu0 0.0
    %520 = vmatprep.subr.mxu0 0.0
    %521 = vmatpush2.msra.mxu0 0.0
    %522 = vmatprep.subr.mxu0 0.0
    %523 = vmatpush2.msra.mxu0 0.0
    %524 = vmatprep.subr.mxu0 0.0
    %525 = vmatpush2.msra.mxu0 0.0
    %526 = vmatprep.subr.mxu0 0.0
    %527 = vmatpush2.msra.mxu0 0.0
    %528 = vmatprep.subr.mxu0 0.0
    %529 = vmatpush2.msra.mxu0 0.0
    %530 = vmatprep.subr.mxu0 0.0
    %531 = vmatpush2.msra.mxu0 0.0
    %532 = vmatprep.subr.mxu0 0.0
    %533 = vmatpush2.msra.mxu0 0.0
    %534 = vmatprep.subr.mxu0 0.0
    %535 = vmatpush2.msra.mxu0 0.0
    %536 = vmatprep.subr.mxu0 0.0
    %537 = vmatpush2.msra.mxu0 0.0
    %538 = vmatprep.mubr.f32.mxu0 0.0
    %539 = vmatmul.mubr.f32.gmra.mxu0 %v472
    %v540 = vpop.f32.mrf.mxu0
    %v541 = vadd.f32 0.0, %v540
    %v542 = vpop.f32.mrf.mxu0
    %543 = vdwg.mxu0
    %545 = vset.pattern.permute.xlu0 0
    %546 = vperm.xlu0 %545, %v302
    %v547 = vpop.permute.xlu0 %546
    %v548 = vlaneseq
    %v549 = vshrl.u32 %v548, 7
    %v550 = vsub.s32 %v174, %v549
    %v551 = vrot.slane %v547, %v550
    %v552 = vsel %vm311, %v551, 0
    %554 = vmatprep.subr.mxu0 0.0
    %555 = vmatpush1.msra.mxu0 0.0
    %556 = vmatprep.subr.mxu0 0.0
    %557 = vmatpush1.msra.mxu0 0.0
    %558 = vmatprep.subr.mxu0 0.0
    %559 = vmatpush1.msra.mxu0 0.0
    %560 = vmatprep.subr.mxu0 0.0
    %561 = vmatpush1.msra.mxu0 0.0
    %562 = vmatprep.subr.mxu0 0.0
    %563 = vmatpush1.msra.mxu0 0.0
    %564 = vmatprep.subr.mxu0 0.0
    %565 = vmatpush1.msra.mxu0 0.0
    %566 = vmatprep.subr.mxu0 0.0
    %567 = vmatpush1.msra.mxu0 0.0
    %568 = vmatprep.subr.mxu0 0.0
    %569 = vmatpush1.msra.mxu0 0.0
    %570 = vmatprep.subr.mxu0 0.0
    %571 = vmatpush1.msra.mxu0 0.0
    %572 = vmatprep.subr.mxu0 0.0
    %573 = vmatpush1.msra.mxu0 0.0
    %574 = vmatprep.subr.mxu0 0.0
    %575 = vmatpush1.msra.mxu0 0.0
    %576 = vmatprep.subr.mxu0 0.0
    %577 = vmatpush1.msra.mxu0 0.0
    %578 = vmatprep.subr.mxu0 0.0
    %579 = vmatpush1.msra.mxu0 0.0
    %580 = vmatprep.subr.mxu0 0.0
    %581 = vmatpush1.msra.mxu0 0.0
    %582 = vmatprep.subr.mxu0 0.0
    %583 = vmatpush1.msra.mxu0 0.0
    %584 = vmatprep.subr.mxu0 0.0
    %585 = vmatpush1.msra.mxu0 %v25
    %586 = vmatprep.subr.mxu0 0.0
    %587 = vmatpush2.msra.mxu0 0.0
    %588 = vmatprep.subr.mxu0 0.0
    %589 = vmatpush2.msra.mxu0 0.0
    %590 = vmatprep.subr.mxu0 0.0
    %591 = vmatpush2.msra.mxu0 0.0
    %592 = vmatprep.subr.mxu0 0.0
    %593 = vmatpush2.msra.mxu0 0.0
    %594 = vmatprep.subr.mxu0 0.0
    %595 = vmatpush2.msra.mxu0 0.0
    %596 = vmatprep.subr.mxu0 0.0
    %597 = vmatpush2.msra.mxu0 0.0
    %598 = vmatprep.subr.mxu0 0.0
    %599 = vmatpush2.msra.mxu0 0.0
    %600 = vmatprep.subr.mxu0 0.0
    %601 = vmatpush2.msra.mxu0 0.0
    %602 = vmatprep.subr.mxu0 0.0
    %603 = vmatpush2.msra.mxu0 0.0
    %604 = vmatprep.subr.mxu0 0.0
    %605 = vmatpush2.msra.mxu0 0.0
    %606 = vmatprep.subr.mxu0 0.0
    %607 = vmatpush2.msra.mxu0 0.0
    %608 = vmatprep.subr.mxu0 0.0
    %609 = vmatpush2.msra.mxu0 0.0
    %610 = vmatprep.subr.mxu0 0.0
    %611 = vmatpush2.msra.mxu0 0.0
    %612 = vmatprep.subr.mxu0 0.0
    %613 = vmatpush2.msra.mxu0 0.0
    %614 = vmatprep.subr.mxu0 0.0
    %615 = vmatpush2.msra.mxu0 0.0
    %616 = vmatprep.subr.mxu0 0.0
    %617 = vmatpush2.msra.mxu0 0.0
    %618 = vmatprep.mubr.f32.mxu0 0.0
    %619 = vmatmul.mubr.f32.gmra.mxu0 %v552
    %v620 = vpop.f32.mrf.mxu0
    %v621 = vadd.f32 0.0, %v620
    %v622 = vpop.f32.mrf.mxu0
    %623 = vdwg.mxu0
    %v628 = vrot.slane %v461, 7
    %v629 = vsel %vm191, %v628, %v381
    %v630 = vrot.slane %v541, 6
    %v631 = vsel %vm193, %v630, %v629
    %v632 = vrot.slane %v621, 5
    %v633 = vsel %vm195, %v632, %v631
    %vm635 = vcmask 257024
    %636 = vst.msk [vmem:[#allocation3] sm:$0xf] %vm635, %v633
    // Predicated region
    $region22: #{tpu_custom_call.1} parent=1 // pred_check
      _
    $region23: #{tpu_custom_call.1} parent=1 // pred_check_branch
      %638 = sbr.rel (0) target = $region25
    $region24: #{tpu_custom_call.1} parent=1 // pred_region
      %s640 = ssub.s32 64, 64
      %641 = vsyncadd [#allocation4], %s640
      %s643 = sshll.u32 [#allocation3], 4
      %s644 = int_to_ptr.vmem [resolvable:$true] %s643
      %646 = dma.vmem_to_hbm [thread:$0]  %s644, 64, %s5, [#allocation4]
    $region25: #{tpu_custom_call.1} parent=1 // pred_fallthru
      _
    // Predicated region
    $region26: #{tpu_custom_call.1} parent=1 // pred_check
      _
    $region27: #{tpu_custom_call.1} parent=1 // pred_check_branch
      %648 = sbr.rel (0) target = $region29
    $region28: #{tpu_custom_call.1} parent=1 // pred_region
      %649 = dma.done [#allocation4], 64
    $region29: #{tpu_custom_call.1} parent=1 // pred_fallthru
      _
    %650 = vsyncpa [#allocation4], 1

</llo_original>
